<compile_context>
chip_gen: v6e
topology: v6e:2x2x1
jax: 0.10.0
libtpu: 0.0.40
codegen_flags: <defaults>
</compile_context>

<pallas_src>
import functools

import jax
import jax.numpy as jnp
from jax import lax
from jax.experimental import pallas as pl
from jax.experimental.pallas import tpu as pltpu

_COS_EPS = 1e-8          # F.cosine_similarity default eps
_BIG = 1e30              # sentinel for excluding same-label entries from the min


def _triplet_row_block_kernel(xq_ref, xk_ref, lab_ref, loss_ref, *,
                              margin, distance_type, n_rows):
    i = pl.program_id(0)

    xq = xq_ref[...]                 # (TM, C) query row block
    xk = xk_ref[...]                 # (N,  C) full embeddings (resident)
    lab_row = lab_ref[...]           # (1,  N) i32 labels (resident)

    tm = xq.shape[0]
    n = xk.shape[0]

    # One MXU pass: every pairwise dot product for this row block.
    g = lax.dot_general(xq, xk, (((1,), (1,)), ((), ())),
                        preferred_element_type=jnp.float32)        # (TM, N)

    # Global-row / column index grids and the identity mask.
    row_g = i * tm + lax.broadcasted_iota(jnp.int32, (tm, n), 0)
    col = lax.broadcasted_iota(jnp.int32, (tm, n), 1)
    ident = row_g == col                                            # eye slice

    # Labels: column view recovered from the single (1, N) operand via a
    # masked lane reduce over the identity mask (no transpose, no 2nd DMA).
    lab_b = jnp.broadcast_to(lab_row, (tm, n))                      # (TM, N)
    lab_col = jnp.sum(jnp.where(ident, lab_b, 0), axis=1,
                      keepdims=True)                                # (TM, 1)
    lab_eq = lab_b == lab_col                                       # (TM, N)
    pos_mask = jnp.logical_and(lab_eq, jnp.logical_not(ident))

    # Squared norms: (TM,1) for the block rows, (1,N) for all keys via a tiny
    # ones-row matmul (keeps the row orientation without a transpose).
    sq_q = jnp.sum(xq * xq, axis=-1, keepdims=True)                 # (TM, 1)
    ones_row = jnp.ones((1, xk.shape[1]), jnp.float32)
    sq_k = lax.dot_general(ones_row, xk * xk, (((1,), (1,)), ((), ())),
                           preferred_element_type=jnp.float32)      # (1, N)

    if distance_type == 'euclidean':
        # Reductions in squared-distance space; sqrt only on (TM,1) results.
        d2 = jnp.maximum(sq_q + sq_k - 2.0 * g, 0.0)                # (TM, N)
        max_pos = jnp.sqrt(jnp.max(jnp.where(pos_mask, d2, 0.0),
                                   axis=1, keepdims=True))          # (TM, 1)
        min_neg = jnp.sqrt(jnp.min(jnp.where(lab_eq, _BIG, d2),
                                   axis=1, keepdims=True))          # (TM, 1)
    elif distance_type == 'cosine':
        inv_q = lax.rsqrt(jnp.maximum(sq_q, _COS_EPS * _COS_EPS))   # (TM, 1)
        inv_k = lax.rsqrt(jnp.maximum(sq_k, _COS_EPS * _COS_EPS))   # (1, N)
        dist = 1.0 - g * inv_q * inv_k                              # (TM, N)
        max_pos = jnp.max(jnp.where(pos_mask, dist, 0.0),
                          axis=1, keepdims=True)
        min_neg = jnp.min(jnp.where(lab_eq, _BIG, dist),
                          axis=1, keepdims=True)
    else:
        raise ValueError(
            "Unsupported distance type. Supported types: 'cosine', 'euclidean'")

    per_row = jnp.maximum(max_pos - min_neg + margin, 0.0)          # (TM, 1)

    # Zero any padding rows of a ragged last block.
    row_ids = i * tm + lax.broadcasted_iota(jnp.int32, (tm, 1), 0)
    loss_ref[...] = jnp.where(row_ids < n_rows, per_row, 0.0)


@functools.partial(jax.jit,
                   static_argnames=("margin", "distance_type", "block_rows"))
def batch_triplet_loss(embeddings, labels, margin=0.2,
                       distance_type='euclidean', block_rows=128):
    """Equivalent of BatchTripletLoss(margin, distance_type)(embeddings, labels)."""
    n, c = embeddings.shape
    x = embeddings.astype(jnp.float32)          # torch.cdist(...).float() path
    lab = labels.astype(jnp.int32).reshape(1, n)

    tm = n if n <= block_rows else block_rows
    grid = (pl.cdiv(n, tm),)

    kernel = functools.partial(_triplet_row_block_kernel,
                               margin=float(margin),
                               distance_type=distance_type,
                               n_rows=n)

    per_row = pl.pallas_call(
        kernel,
        out_shape=jax.ShapeDtypeStruct((n, 1), jnp.float32),
        grid_spec=pltpu.PrefetchScalarGridSpec(
            num_scalar_prefetch=0,
            grid=grid,
            in_specs=[
                pl.BlockSpec((tm, c), lambda i: (i, 0)),   # query row block
                pl.BlockSpec((n, c), lambda i: (0, 0)),    # full X, resident
                pl.BlockSpec((1, n), lambda i: (0, 0)),    # labels, resident
            ],
            out_specs=pl.BlockSpec((tm, 1), lambda i: (i, 0)),
        ),
        compiler_params=pltpu.CompilerParams(
            dimension_semantics=("parallel",)),
    )(x, x, lab)

    # Tiny fused reduce in the jitted wrapper (keeps the grid axis parallel-safe).
    return jnp.sum(per_row) / n


def reference_batch_triplet_loss(embeddings, labels, margin=0.2,
                                 distance_type='euclidean'):
    """Pure-JAX reference mirroring the PyTorch module."""
    x = embeddings.astype(jnp.float32)
    n = labels.shape[0]
    if distance_type == 'cosine':
        nrm = jnp.linalg.norm(x, axis=-1)
        sim = (x @ x.T) / jnp.maximum(nrm[:, None] * nrm[None, :], _COS_EPS)
        dist = 1.0 - sim
    elif distance_type == 'euclidean':
        d2 = jnp.sum((x[:, None, :] - x[None, :, :]) ** 2, axis=-1)
        dist = jnp.sqrt(jnp.maximum(d2, 0.0))
    else:
        raise ValueError("Unsupported distance type.")

    ident = jnp.eye(n, dtype=bool)
    lab_eq = labels[None, :] == labels[:, None]
    pos_mask = lab_eq & ~ident
    max_pos = jnp.max(dist * pos_mask.astype(jnp.float32), axis=1)
    min_neg = jnp.min(dist + lab_eq.astype(jnp.float32) * 999.0, axis=1)
    return jnp.mean(jnp.maximum(max_pos - min_neg + margin, 0.0))


if __name__ == "__main__":
    key = jax.random.PRNGKey(0)
    kx1, kl1, kx2, kl2 = jax.random.split(key, 4)
    embed_dim = 128     # lane-dense last dim (full 128-lane vregs)

    # Small demo shape (single-block grid).
    n_small = 8
    emb_small = jax.random.normal(kx1, (n_small, embed_dim), dtype=jnp.float32)
    lab_small = jax.random.randint(kl1, (n_small,), 0, 3, dtype=jnp.int32)

    for dist_type in ("euclidean", "cosine"):
        out = jax.block_until_ready(
            batch_triplet_loss(emb_small, lab_small, 0.2, dist_type))
        ref = reference_batch_triplet_loss(emb_small, lab_small, 0.2, dist_type)
        assert jnp.allclose(out, ref, atol=1e-3, rtol=1e-3), (dist_type, out, ref)

    # Larger shape exercising the multi-step row-block grid (2 blocks of 128).
    n_big = 256
    emb_big = jax.random.normal(kx2, (n_big, embed_dim), dtype=jnp.float32)
    lab_big = jax.random.randint(kl2, (n_big,), 0, 8, dtype=jnp.int32)

    for dist_type in ("euclidean", "cosine"):
        out = jax.block_until_ready(
            batch_triplet_loss(emb_big, lab_big, 0.2, dist_type))
        ref = reference_batch_triplet_loss(emb_big, lab_big, 0.2, dist_type)
        assert jnp.allclose(out, ref, atol=1e-3, rtol=1e-3), (dist_type, out, ref)

    print("KERNEL_OK")
</pallas_src>

<mosaic_0001>
module attributes {stable_mosaic.version = 11 : i64} {
  func.func @_triplet_row_block_kernel(%arg0: i32, %arg1: memref<8x128xf32, #tpu.memory_space<vmem>>, %arg2: memref<8x128xf32, #tpu.memory_space<vmem>>, %arg3: memref<1x8xi32, #tpu.memory_space<vmem>>, %arg4: memref<8x1xf32, #tpu.memory_space<vmem>>) attributes {dimension_semantics = [#tpu.dimension_semantics<parallel>], iteration_bounds = array<i64: 1>, scalar_prefetch = 0 : i64, scratch_operands = 0 : i64, tpu.core_type = #tpu.core_type<tc>, window_params = [{transform_indices = @transform_0, window_bounds = array<i64: 8, 128>}, {pipeline_mode = #tpu.pipeline_mode<synchronous>, transform_indices = @transform_1, window_bounds = array<i64: 8, 128>}, {pipeline_mode = #tpu.pipeline_mode<synchronous>, transform_indices = @transform_2, window_bounds = array<i64: 1, 8>}, {transform_indices = @transform_3, window_bounds = array<i64: 8, 1>}]} {
    %c0 = arith.constant 0 : index
    %c0_0 = arith.constant 0 : index
    %0 = vector.load %arg1[%c0, %c0_0] : memref<8x128xf32, #tpu.memory_space<vmem>>, vector<8x128xf32>
    %c0_1 = arith.constant 0 : index
    %c0_2 = arith.constant 0 : index
    %1 = vector.load %arg2[%c0_1, %c0_2] : memref<8x128xf32, #tpu.memory_space<vmem>>, vector<8x128xf32>
    %c0_3 = arith.constant 0 : index
    %c0_4 = arith.constant 0 : index
    %2 = vector.load %arg3[%c0_3, %c0_4] : memref<1x8xi32, #tpu.memory_space<vmem>>, vector<1x8xi32>
    %cst = arith.constant dense<0.000000e+00> : vector<8x8xf32>
    %3 = tpu.matmul %0, %1, %cst {dimension_numbers = #tpu.dot_dimension_numbers<[1], [1], [0], [0], [0, 0, 1, 0], [], []>} : vector<8x128xf32>, vector<8x128xf32>, vector<8x8xf32> -> vector<8x8xf32>
    %c8_i32 = arith.constant 8 : i32
    %4 = arith.muli %arg0, %c8_i32 : i32
    %5 = tpu.iota {dimensions = array<i32: 0>} : vector<8x8xi32>
    %6 = vector.broadcast %4 : i32 to vector<8x8xi32>
    %7 = arith.addi %6, %5 : vector<8x8xi32>
    %8 = tpu.iota {dimensions = array<i32: 1>} : vector<8x8xi32>
    %9 = arith.cmpi eq, %7, %8 : vector<8x8xi32>
    %10 = vector.shape_cast %2 : vector<1x8xi32> to vector<1x8xi32>
    %11 = vector.broadcast %10 : vector<1x8xi32> to vector<8x8xi32>
    %c0_i32 = arith.constant 0 : i32
    %12 = vector.broadcast %c0_i32 : i32 to vector<8x8xi32>
    %13 = arith.select %9, %11, %12 : vector<8x8xi1>, vector<8x8xi32>
    %cst_5 = arith.constant dense<0> : vector<8xi32>
    %14 = vector.multi_reduction <add>, %13, %cst_5 [1] : vector<8x8xi32> to vector<8xi32>
    %15 = vector.shape_cast %14 : vector<8xi32> to vector<8x1xi32>
    %16 = vector.broadcast %15 : vector<8x1xi32> to vector<8x8xi32>
    %17 = arith.cmpi eq, %11, %16 : vector<8x8xi32>
    %cst_6 = arith.constant dense<true> : vector<8x8xi1>
    %18 = arith.xori %9, %cst_6 : vector<8x8xi1>
    %19 = arith.andi %17, %18 : vector<8x8xi1>
    %20 = arith.mulf %0, %0 : vector<8x128xf32>
    %cst_7 = arith.constant dense<0.000000e+00> : vector<8xf32>
    %21 = vector.multi_reduction <add>, %20, %cst_7 [1] : vector<8x128xf32> to vector<8xf32>
    %22 = vector.shape_cast %21 : vector<8xf32> to vector<8x1xf32>
    %cst_8 = arith.constant 1.000000e+00 : f32
    %23 = vector.broadcast %cst_8 : f32 to vector<1x128xf32>
    %24 = arith.mulf %1, %1 : vector<8x128xf32>
    %cst_9 = arith.constant dense<0.000000e+00> : vector<1x8xf32>
    %25 = tpu.matmul %23, %24, %cst_9 {dimension_numbers = #tpu.dot_dimension_numbers<[1], [1], [0], [0], [0, 0, 1, 0], [], []>} : vector<1x128xf32>, vector<8x128xf32>, vector<1x8xf32> -> vector<1x8xf32>
    %26 = vector.broadcast %22 : vector<8x1xf32> to vector<8x8xf32>
    %27 = vector.broadcast %25 : vector<1x8xf32> to vector<8x8xf32>
    %28 = arith.addf %26, %27 : vector<8x8xf32>
    %cst_10 = arith.constant 2.000000e+00 : f32
    %29 = vector.broadcast %cst_10 : f32 to vector<8x8xf32>
    %30 = arith.mulf %29, %3 : vector<8x8xf32>
    %31 = arith.subf %28, %30 : vector<8x8xf32>
    %cst_11 = arith.constant 0.000000e+00 : f32
    %32 = vector.broadcast %cst_11 : f32 to vector<8x8xf32>
    %33 = arith.maximumf %31, %32 : vector<8x8xf32>
    %cst_12 = arith.constant 0.000000e+00 : f32
    %34 = vector.broadcast %cst_12 : f32 to vector<8x8xf32>
    %35 = arith.select %19, %33, %34 : vector<8x8xi1>, vector<8x8xf32>
    %cst_13 = arith.constant dense<0xFF800000> : vector<8xf32>
    %36 = vector.multi_reduction <maximumf>, %35, %cst_13 [1] : vector<8x8xf32> to vector<8xf32>
    %37 = vector.shape_cast %36 : vector<8xf32> to vector<8x1xf32>
    %38 = math.sqrt %37 : vector<8x1xf32>
    %cst_14 = arith.constant 1.000000e+30 : f32
    %39 = vector.broadcast %cst_14 : f32 to vector<8x8xf32>
    %40 = arith.select %17, %39, %33 : vector<8x8xi1>, vector<8x8xf32>
    %cst_15 = arith.constant dense<0x7F800000> : vector<8xf32>
    %41 = vector.multi_reduction <minimumf>, %40, %cst_15 [1] : vector<8x8xf32> to vector<8xf32>
    %42 = vector.shape_cast %41 : vector<8xf32> to vector<8x1xf32>
    %43 = math.sqrt %42 : vector<8x1xf32>
    %44 = arith.subf %38, %43 : vector<8x1xf32>
    %cst_16 = arith.constant 2.000000e-01 : f32
    %45 = vector.broadcast %cst_16 : f32 to vector<8x1xf32>
    %46 = arith.addf %44, %45 : vector<8x1xf32>
    %cst_17 = arith.constant 0.000000e+00 : f32
    %47 = vector.broadcast %cst_17 : f32 to vector<8x1xf32>
    %48 = arith.maximumf %46, %47 : vector<8x1xf32>
    %c8_i32_18 = arith.constant 8 : i32
    %49 = arith.muli %arg0, %c8_i32_18 : i32
    %50 = tpu.iota {dimensions = array<i32: 0>} : vector<8x1xi32>
    %51 = vector.broadcast %49 : i32 to vector<8x1xi32>
    %52 = arith.addi %51, %50 : vector<8x1xi32>
    %c8_i32_19 = arith.constant 8 : i32
    %53 = vector.broadcast %c8_i32_19 : i32 to vector<8x1xi32>
    %54 = arith.cmpi slt, %52, %53 : vector<8x1xi32>
    %cst_20 = arith.constant 0.000000e+00 : f32
    %55 = vector.broadcast %cst_20 : f32 to vector<8x1xf32>
    %56 = arith.select %54, %48, %55 : vector<8x1xi1>, vector<8x1xf32>
    %c0_21 = arith.constant 0 : index
    %c0_22 = arith.constant 0 : index
    %57 = vector.load %arg4[%c0_21, %c0_22] : memref<8x1xf32, #tpu.memory_space<vmem>>, vector<8x1xf32>
    tpu.vector_store %arg4[%c0_21, %c0_22], %56 {strides = array<i32>} : memref<8x1xf32, #tpu.memory_space<vmem>>, vector<8x1xf32>,
    return
  }
  func.func @transform_0(%arg0: i32) -> (i32, i32) {
    %c0_i32 = arith.constant 0 : i32
    %c0_i32_0 = arith.constant 0 : i32
    return %arg0, %c0_i32 : i32, i32
  }
  func.func @transform_1(%arg0: i32) -> (i32, i32) {
    %c0_i32 = arith.constant 0 : i32
    %c0_i32_0 = arith.constant 0 : i32
    %c0_i32_1 = arith.constant 0 : i32
    return %c0_i32, %c0_i32_0 : i32, i32
  }
  func.func @transform_2(%arg0: i32) -> (i32, i32) {
    %c0_i32 = arith.constant 0 : i32
    %c0_i32_0 = arith.constant 0 : i32
    %c0_i32_1 = arith.constant 0 : i32
    return %c0_i32, %c0_i32_0 : i32, i32
  }
  func.func @transform_3(%arg0: i32) -> (i32, i32) {
    %c0_i32 = arith.constant 0 : i32
    %c0_i32_0 = arith.constant 0 : i32
    return %arg0, %c0_i32 : i32, i32
  }
}

</mosaic_0001>

<llo_original>
// kernel: batch_triplet_loss.1
$region0: #{batch_triplet_loss.1}
  #allocation0 [shape = 'u32[]', space=smem, size = 0x4, offset = 0x4, fixed_abs, tag = 'smem constant byte address 0x4 - core index']
  #allocation1 [shape = 'u32[144,128]{1,0:T(1,128)}', space=vmem, size = 0x12000, scoped, tag = 'internal scratch']
  %s0 = inlined_call_operand.hbm [shape: f32[8,128], index: 0, kind: input, shape index: {}, may-alias: {0,1}]
  %s1 = inlined_call_operand.hbm [shape: f32[8,128], index: 1, kind: input, shape index: {}, may-alias: {0,1}]
  %s2 = inlined_call_operand.vmem [shape: s32[1,8], index: 2, kind: input, shape index: {}]
  %s3 = inlined_call_operand.vmem [shape: f32[8,1], index: 3, kind: output, shape index: {}]
  %s4 = sld [smem:[#allocation0]]
  $region30: #{batch_triplet_loss.1} parent=0
    _
  %s6 = ssub.s32 1, %s4
  %s7 = scalar_select 0, %s6, %s4
  $region1: #{batch_triplet_loss.1} parent=0
    #allocation2 [shape = 'u8[4096]{0}', space=vmem, size = 0x1000, scoped, tag = 'input window, operand 0, single buffered']
    #allocation3 [shape = 's32[1]{0}', space=sflag, size = 0x4, scoped, tag = 'scoped memory for batch_triplet_loss.1']
    #allocation4 [shape = 'u8[4096]{0}', space=vmem, size = 0x1000, scoped, tag = 'input window, operand 1, single buffered']
    #allocation5 [shape = 's32[1]{0}', space=sflag, size = 0x4, scoped, tag = 'scoped memory for batch_triplet_loss.1']
    %8 = vsyncpa [#allocation3], 0
    %9 = vsyncpa [#allocation5], 0
    // Predicated region
    $region2: #{batch_triplet_loss.1} parent=1 // pred_check
      _
    $region3: #{batch_triplet_loss.1} parent=1 // pred_check_branch
      %11 = sbr.rel (0) target = $region5
    $region4: #{batch_triplet_loss.1} parent=1 // pred_region
      %s13 = ssub.s32 128, 128
      %14 = vsyncadd [#allocation3], %s13
      %s16 = sshll.u32 [#allocation2], 4
      %s17 = int_to_ptr.vmem [resolvable:$true] %s16
      %19 = dma.hbm_to_vmem [thread:$0]  %s0, 128, %s17, [#allocation3]
    $region5: #{batch_triplet_loss.1} parent=1 // pred_fallthru
      _
    // Predicated region
    $region6: #{batch_triplet_loss.1} parent=1 // pred_check
      _
    $region7: #{batch_triplet_loss.1} parent=1 // pred_check_branch
      %21 = sbr.rel (0) target = $region9
    $region8: #{batch_triplet_loss.1} parent=1 // pred_region
      %s23 = ssub.s32 128, 128
      %24 = vsyncadd [#allocation5], %s23
      %s26 = sshll.u32 [#allocation4], 4
      %s27 = int_to_ptr.vmem [resolvable:$true] %s26
      %29 = dma.hbm_to_vmem [thread:$0]  %s1, 128, %s27, [#allocation5]
    $region9: #{batch_triplet_loss.1} parent=1 // pred_fallthru
      _
    // Predicated region
    $region10: #{batch_triplet_loss.1} parent=1 // pred_check
      _
    $region11: #{batch_triplet_loss.1} parent=1 // pred_check_branch
      %31 = sbr.rel (0) target = $region13
    $region12: #{batch_triplet_loss.1} parent=1 // pred_region
      _
    $region13: #{batch_triplet_loss.1} parent=1 // pred_fallthru
      _
    // Predicated region
    $region14: #{batch_triplet_loss.1} parent=1 // pred_check
      _
    $region15: #{batch_triplet_loss.1} parent=1 // pred_check_branch
      %33 = sbr.rel (0) target = $region17
    $region16: #{batch_triplet_loss.1} parent=1 // pred_region
      %34 = dma.done [#allocation3], 128
    $region17: #{batch_triplet_loss.1} parent=1 // pred_fallthru
      _
    // Predicated region
    $region18: #{batch_triplet_loss.1} parent=1 // pred_check
      _
    $region19: #{batch_triplet_loss.1} parent=1 // pred_check_branch
      %36 = sbr.rel (0) target = $region21
    $region20: #{batch_triplet_loss.1} parent=1 // pred_region
      %37 = dma.done [#allocation5], 128
    $region21: #{batch_triplet_loss.1} parent=1 // pred_fallthru
      _
    %v38 = vld [vmem:[#allocation2] sm:$0xff]
    %v39 = vld [vmem:[#allocation4] sm:$0xff]
    %v40 = vld [vmem:[%s2] sm:$0x1]
    %41 = vmatprep.subr.mxu0 0.0
    %42 = vmatpush1.xpose.msra.mxu0 0.0
    %43 = vmatprep.subr.mxu0 0.0
    %44 = vmatpush1.xpose.msra.mxu0 0.0
    %45 = vmatprep.subr.mxu0 0.0
    %46 = vmatpush1.xpose.msra.mxu0 0.0
    %47 = vmatprep.subr.mxu0 0.0
    %48 = vmatpush1.xpose.msra.mxu0 0.0
    %49 = vmatprep.subr.mxu0 0.0
    %50 = vmatpush1.xpose.msra.mxu0 0.0
    %51 = vmatprep.subr.mxu0 0.0
    %52 = vmatpush1.xpose.msra.mxu0 0.0
    %53 = vmatprep.subr.mxu0 0.0
    %54 = vmatpush1.xpose.msra.mxu0 0.0
    %55 = vmatprep.subr.mxu0 0.0
    %56 = vmatpush1.xpose.msra.mxu0 0.0
    %57 = vmatprep.subr.mxu0 0.0
    %58 = vmatpush1.xpose.msra.mxu0 0.0
    %59 = vmatprep.subr.mxu0 0.0
    %60 = vmatpush1.xpose.msra.mxu0 0.0
    %61 = vmatprep.subr.mxu0 0.0
    %62 = vmatpush1.xpose.msra.mxu0 0.0
    %63 = vmatprep.subr.mxu0 0.0
    %64 = vmatpush1.xpose.msra.mxu0 0.0
    %65 = vmatprep.subr.mxu0 0.0
    %66 = vmatpush1.xpose.msra.mxu0 0.0
    %67 = vmatprep.subr.mxu0 0.0
    %68 = vmatpush1.xpose.msra.mxu0 0.0
    %69 = vmatprep.subr.mxu0 0.0
    %70 = vmatpush1.xpose.msra.mxu0 0.0
    %71 = vmatprep.subr.mxu0 0.0
    %72 = vmatpush1.xpose.msra.mxu0 %v39
    %73 = vmatprep.subr.mxu0 0.0
    %74 = vmatpush2.xpose.msra.mxu0 0.0
    %75 = vmatprep.subr.mxu0 0.0
    %76 = vmatpush2.xpose.msra.mxu0 0.0
    %77 = vmatprep.subr.mxu0 0.0
    %78 = vmatpush2.xpose.msra.mxu0 0.0
    %79 = vmatprep.subr.mxu0 0.0
    %80 = vmatpush2.xpose.msra.mxu0 0.0
    %81 = vmatprep.subr.mxu0 0.0
    %82 = vmatpush2.xpose.msra.mxu0 0.0
    %83 = vmatprep.subr.mxu0 0.0
    %84 = vmatpush2.xpose.msra.mxu0 0.0
    %85 = vmatprep.subr.mxu0 0.0
    %86 = vmatpush2.xpose.msra.mxu0 0.0
    %87 = vmatprep.subr.mxu0 0.0
    %88 = vmatpush2.xpose.msra.mxu0 0.0
    %89 = vmatprep.subr.mxu0 0.0
    %90 = vmatpush2.xpose.msra.mxu0 0.0
    %91 = vmatprep.subr.mxu0 0.0
    %92 = vmatpush2.xpose.msra.mxu0 0.0
    %93 = vmatprep.subr.mxu0 0.0
    %94 = vmatpush2.xpose.msra.mxu0 0.0
    %95 = vmatprep.subr.mxu0 0.0
    %96 = vmatpush2.xpose.msra.mxu0 0.0
    %97 = vmatprep.subr.mxu0 0.0
    %98 = vmatpush2.xpose.msra.mxu0 0.0
    %99 = vmatprep.subr.mxu0 0.0
    %100 = vmatpush2.xpose.msra.mxu0 0.0
    %101 = vmatprep.subr.mxu0 0.0
    %102 = vmatpush2.xpose.msra.mxu0 0.0
    %103 = vmatprep.subr.mxu0 0.0
    %104 = vmatpush2.xpose.msra.mxu0 0.0
    %105 = vmatprep.mubr.f32.mxu0 0.0
    %106 = vmatmul.mubr.f32.gmra.mxu0 %v38
    %v107 = vpop.f32.mrf.mxu0
    %v108 = vadd.f32 0.0, %v107
    %v109 = vpop.f32.mrf.mxu0
    %110 = vdwg.mxu0
    %s111 = smul.u32 0, 8
    %v112 = vlaneseq
    %v113 = vshrl.u32 %v112, 7
    %v114 = vstv %s111
    %v115 = vadd.s32 %v114, %v113
    %v116 = vlaneseq
    %v117 = vand.u32 %v116, 127
    %vm118 = vcmp.eq.s32.totalorder %v115, %v117
    %v119 = vlaneseq
    %v120 = vshrl.u32 %v119, 7
    %v121 = vsub.s32 0, %v120
    %v122 = vrot.slane %v40, %v121
    %v123 = vsel %vm118, %v122, 0
    %vm124 = vcmask 64512
    %v125 = vsel %vm124, %v123, 0
    %v126 = vand.u32 %v125, 65535
    %v127 = vshrl.u32 %v125, 16
    %v128 = vcvt.s32.f32 %v126
    %v129 = vcvt.s32.f32 %v127
    %130 = vadd.xlane.f32.xlu0 %v128
    %v131 = vpop.xlane.xlu0 %130
    %132 = vadd.xlane.f32.xlu0 %v129
    %v133 = vpop.xlane.xlu0 %132
    %v134 = vcvt.f32.s32 %v131
    %v135 = vcvt.f32.s32 %v133
    %v136 = vshll.u32 %v135, 16
    %v137 = vadd.s32 %v136, %v134
    %vm138 = vcmp.eq.s32.totalorder %v122, %v137
    %vm139 = vmxor %vm118, 1
    %vm140 = vmand %vm138, %vm139
    %v141 = vmul.f32 %v38, %v38
    %142 = vadd.xlane.f32.xlu0 %v141
    %v143 = vpop.xlane.xlu0 %142
    %v144 = vmul.f32 %v39, %v39
    %145 = vmatprep.subr.mxu0 0.0
    %146 = vmatpush1.xpose.msra.mxu0 0.0
    %147 = vmatprep.subr.mxu0 0.0
    %148 = vmatpush1.xpose.msra.mxu0 0.0
    %149 = vmatprep.subr.mxu0 0.0
    %150 = vmatpush1.xpose.msra.mxu0 0.0
    %151 = vmatprep.subr.mxu0 0.0
    %152 = vmatpush1.xpose.msra.mxu0 0.0
    %153 = vmatprep.subr.mxu0 0.0
    %154 = vmatpush1.xpose.msra.mxu0 0.0
    %155 = vmatprep.subr.mxu0 0.0
    %156 = vmatpush1.xpose.msra.mxu0 0.0
    %157 = vmatprep.subr.mxu0 0.0
    %158 = vmatpush1.xpose.msra.mxu0 0.0
    %159 = vmatprep.subr.mxu0 0.0
    %160 = vmatpush1.xpose.msra.mxu0 0.0
    %161 = vmatprep.subr.mxu0 0.0
    %162 = vmatpush1.xpose.msra.mxu0 0.0
    %163 = vmatprep.subr.mxu0 0.0
    %164 = vmatpush1.xpose.msra.mxu0 0.0
    %165 = vmatprep.subr.mxu0 0.0
    %166 = vmatpush1.xpose.msra.mxu0 0.0
    %167 = vmatprep.subr.mxu0 0.0
    %168 = vmatpush1.xpose.msra.mxu0 0.0
    %169 = vmatprep.subr.mxu0 0.0
    %170 = vmatpush1.xpose.msra.mxu0 0.0
    %171 = vmatprep.subr.mxu0 0.0
    %172 = vmatpush1.xpose.msra.mxu0 0.0
    %173 = vmatprep.subr.mxu0 0.0
    %174 = vmatpush1.xpose.msra.mxu0 0.0
    %175 = vmatprep.subr.mxu0 0.0
    %176 = vmatpush1.xpose.msra.mxu0 %v144
    %177 = vmatprep.subr.mxu0 0.0
    %178 = vmatpush2.xpose.msra.mxu0 0.0
    %179 = vmatprep.subr.mxu0 0.0
    %180 = vmatpush2.xpose.msra.mxu0 0.0
    %181 = vmatprep.subr.mxu0 0.0
    %182 = vmatpush2.xpose.msra.mxu0 0.0
    %183 = vmatprep.subr.mxu0 0.0
    %184 = vmatpush2.xpose.msra.mxu0 0.0
    %185 = vmatprep.subr.mxu0 0.0
    %186 = vmatpush2.xpose.msra.mxu0 0.0
    %187 = vmatprep.subr.mxu0 0.0
    %188 = vmatpush2.xpose.msra.mxu0 0.0
    %189 = vmatprep.subr.mxu0 0.0
    %190 = vmatpush2.xpose.msra.mxu0 0.0
    %191 = vmatprep.subr.mxu0 0.0
    %192 = vmatpush2.xpose.msra.mxu0 0.0
    %193 = vmatprep.subr.mxu0 0.0
    %194 = vmatpush2.xpose.msra.mxu0 0.0
    %195 = vmatprep.subr.mxu0 0.0
    %196 = vmatpush2.xpose.msra.mxu0 0.0
    %197 = vmatprep.subr.mxu0 0.0
    %198 = vmatpush2.xpose.msra.mxu0 0.0
    %199 = vmatprep.subr.mxu0 0.0
    %200 = vmatpush2.xpose.msra.mxu0 0.0
    %201 = vmatprep.subr.mxu0 0.0
    %202 = vmatpush2.xpose.msra.mxu0 0.0
    %203 = vmatprep.subr.mxu0 0.0
    %204 = vmatpush2.xpose.msra.mxu0 0.0
    %205 = vmatprep.subr.mxu0 0.0
    %206 = vmatpush2.xpose.msra.mxu0 0.0
    %207 = vmatprep.subr.mxu0 0.0
    %208 = vmatpush2.xpose.msra.mxu0 0.0
    %209 = vmatprep.mubr.f32.mxu0 0.0
    %210 = vmatmul.mubr.f32.gmra.mxu0 1.0
    %v211 = vpop.f32.mrf.mxu0
    %v212 = vadd.f32 0.0, %v211
    %v213 = vpop.f32.mrf.mxu0
    %214 = vdwg.mxu0
    %v215 = vlaneseq
    %v216 = vshrl.u32 %v215, 7
    %v217 = vsub.s32 0, %v216
    %v218 = vrot.slane %v212, %v217
    %v219 = vadd.f32 %v143, %v218
    %v220 = vmul.f32 %v108, 2.0
    %v221 = vsub.f32 %v219, %v220
    %v222 = vmax.f32 %v221, 0.0
    %v223 = vsel %vm140, %v222, 0.0
    %v224 = vsel %vm124, %v223, -inf
    %225 = vmax.xlane.f32.xlu0 %v224
    %v226 = vpop.xlane.xlu0 %225
    %v227 = vrsqrt.pop %v226
    %v228 = vmul.f32 %v226, %v227
    %vm229 = vcmp.eq.f32.partialorder %v226, inf
    %v230 = vsel %vm229, %v226, %v228
    %vm231 = vcmp.eq.f32.partialorder %v226, 0.0
    %v232 = vand.u32 %v226, 2147483648
    %v233 = vsel %vm231, %v232, %v230
    %v234 = vsel %vm138, 1e+30, %v222
    %v235 = vsel %vm124, %v234, inf
    %236 = vmin.xlane.f32.xlu0 %v235
    %v237 = vpop.xlane.xlu0 %236
    %v238 = vrsqrt.pop %v237
    %v239 = vmul.f32 %v237, %v238
    %vm240 = vcmp.eq.f32.partialorder %v237, inf
    %v241 = vsel %vm240, %v237, %v239
    %vm242 = vcmp.eq.f32.partialorder %v237, 0.0
    %v243 = vand.u32 %v237, 2147483648
    %v244 = vsel %vm242, %v243, %v241
    %v245 = vsub.f32 %v233, %v244
    %v246 = vadd.f32 %v245, 0.2
    %v247 = vmax.f32 %v246, 0.0
    %vm248 = vcmp.lt.s32.totalorder %v115, 8
    %v249 = vsel %vm248, %v247, 0.0
    %vm250 = vcmask 7168
    %251 = vst.msk [vmem:[%s3] sm:$0xff] %vm250, %v249
    // Predicated region
    $region22: #{batch_triplet_loss.1} parent=1 // pred_check
      _
    $region23: #{batch_triplet_loss.1} parent=1 // pred_check_branch
      %253 = sbr.rel (0) target = $region25
    $region24: #{batch_triplet_loss.1} parent=1 // pred_region
      _
    $region25: #{batch_triplet_loss.1} parent=1 // pred_fallthru
      _
    // Predicated region
    $region26: #{batch_triplet_loss.1} parent=1 // pred_check
      _
    $region27: #{batch_triplet_loss.1} parent=1 // pred_check_branch
      %255 = sbr.rel (0) target = $region29
    $region28: #{batch_triplet_loss.1} parent=1 // pred_region
      _
    $region29: #{batch_triplet_loss.1} parent=1 // pred_fallthru
      _
    %256 = vsyncpa [#allocation3], 1
    %257 = vsyncpa [#allocation5], 1

</llo_original>
